<compile_context>
chip_gen: v7x
topology: tpu7x:2x2x1
jax: 0.10.0
libtpu: 0.0.40
codegen_flags: <defaults>
</compile_context>

<pallas_src>
import functools
import math

import jax
import jax.numpy as jnp
from jax.experimental import pallas as pl
from jax.experimental.pallas import tpu as pltpu

_INV_SQRT2 = 1.0 / math.sqrt(2.0)


def _cdiv(a, b):
    return -(-a // b)


def _round_up(x, m):
    return (x + m - 1) // m * m


def _gelu(h, use_tanh):
    if use_tanh:
        # tanh/exp run on the EUP (its own bundle slot) -> near-free when VALU-bound.
        return jax.nn.gelu(h, approximate=True)
    # Exact erf GELU: strict parity with PyTorch nn.GELU() default.
    return 0.5 * h * (1.0 + jax.lax.erf(h * _INV_SQRT2))


def _flow_reference(x2, w1, b1, w2, b2, use_tanh):
    """Pure-JAX reference (also used as the small-D XLA fallback)."""
    h = x2.astype(jnp.float32) @ w1.astype(jnp.float32) + b1.astype(jnp.float32)
    h = _gelu(h, use_tanh)
    y = h @ w2.astype(jnp.float32) + b2.astype(jnp.float32)
    return jnp.where(jnp.isfinite(y), y, 0.0)


# ----------------------------------------------------------------------------- kernels


def _fused_kernel(x_ref, w1_ref, b1_ref, w2_ref, b2_ref, o_ref, *, use_tanh_gelu):
    """n_hc == 1: whole hidden dim resident, no accumulator scratch, no pl.when."""
    h = jnp.dot(x_ref[...], w1_ref[...], preferred_element_type=jnp.float32)
    h = h + b1_ref[...].astype(jnp.float32)
    h = _gelu(h, use_tanh_gelu)
    # Dropout(p) in eval mode == identity.
    y = jnp.dot(h.astype(w2_ref.dtype), w2_ref[...], preferred_element_type=jnp.float32)
    y = y + b2_ref[...].astype(jnp.float32)
    # torch.nan_to_num(nan=0.0, posinf=0.0, neginf=0.0)
    o_ref[...] = jnp.where(jnp.isfinite(y), y, 0.0).astype(o_ref.dtype)


def _chunked_kernel(x_ref, w1_ref, b1_ref, w2_ref, b2_ref, o_ref, acc_ref, *, use_tanh_gelu):
    """n_hc > 1: hidden dim split into chunks; f32 accumulator with write-on-first-chunk."""
    hc = pl.program_id(1)

    h = jnp.dot(x_ref[...], w1_ref[...], preferred_element_type=jnp.float32)
    h = h + b1_ref[...].astype(jnp.float32)
    h = _gelu(h, use_tanh_gelu)
    part = jnp.dot(h.astype(w2_ref.dtype), w2_ref[...], preferred_element_type=jnp.float32)

    @pl.when(hc == 0)
    def _first():
        acc_ref[...] = part          # write-on-first: no zero-fill + readback

    @pl.when(hc != 0)
    def _accum():
        acc_ref[...] += part

    @pl.when(hc == pl.num_programs(1) - 1)
    def _finalize():
        y = acc_ref[...] + b2_ref[...].astype(jnp.float32)
        o_ref[...] = jnp.where(jnp.isfinite(y), y, 0.0).astype(o_ref.dtype)


# ----------------------------------------------------------------------------- sizing


def _vmem_capacity_bytes():
    """Physical VMEM per core; conservative 64 MiB (v7x-sized) if the query is unavailable."""
    try:
        info_fn = getattr(pltpu, "get_tpu_info", None)
        if info_fn is not None:
            cap = getattr(info_fn(), "vmem_capacity_bytes", None)
            if cap:
                return int(cap)
    except Exception:  # query failure only falls back to a conservative constant
        pass
    return 64 * 1024 * 1024


def _choose_h_chunk(D, H, w_itemsize, budget_bytes):
    """Largest hidden-dim chunk (an exact divisor of H, MXU-aligned) whose resident,
    double-buffered W1/W2/b1 slices fit the weight budget. Never falls through over
    budget: if nothing fits, the smallest aligned divisor is returned."""

    def resident(th):
        # W1 chunk (D,th) + W2 chunk (th,D) + b1 chunk, x2 for default double buffering.
        return 2 * (2 * D * th + th) * w_itemsize

    align = 256 if H % 256 == 0 else 128   # 256-wide MXU on v6e/v7x; 128 suffices on v5e
    if resident(H) <= budget_bytes or H % align != 0:
        return H
    divisors = [t for t in range(align, H, align) if H % t == 0]
    if not divisors:
        return H
    fitting = [t for t in divisors if resident(t) <= budget_bytes]
    return max(fitting) if fitting else min(divisors)


# ----------------------------------------------------------------------------- wrapper


def tangent_flow_mlp(v_tangent, w1, b1, w2, b2, *, use_tanh_gelu=False,
                     h_chunk=None, small_d_xla_fallback=True):
    """TangentFlow('mlp') displacement.

    v_tangent: (..., D). w1: (D, H), b1: (H,), w2: (H, D), b2: (D,).
    Returns the flow displacement with the same shape/dtype as v_tangent.
    """
    orig_shape = v_tangent.shape
    D = orig_shape[-1]
    H = w1.shape[1]
    assert w1.shape == (D, H) and b1.shape == (H,)
    assert w2.shape == (H, D) and b2.shape == (D,)

    M = 1
    for s in orig_shape[:-1]:
        M *= s
    x2 = v_tangent.reshape(M, D)

    if small_d_xla_fallback and D < 128:
        # Lane-sparse (<128) output tiles hit masked partial stores and the MXU contraction
        # is badly underfilled; at this size plain XLA fusion beats the pallas_call overhead.
        y = _flow_reference(x2, w1, b1, w2, b2, use_tanh_gelu)
        return y.astype(v_tangent.dtype).reshape(orig_shape)

    # ---- row tiling: big 8-aligned tiles; >=2 tiles when M > 256 so v7x's two
    # TensorCores both get work on the "parallel" row axis.
    if M <= 256:
        tm = _round_up(M, 8)
    else:
        tm = min(512, _round_up(_cdiv(M, 2), 8))
    n_rows = _cdiv(M, tm)   # ragged boundary block handled by Pallas (no wrapper pad/slice)

    # ---- generation-aware VMEM budgeting.
    cap = _vmem_capacity_bytes()
    vmem_limit = min(cap * 3 // 4, 100 * 1024 * 1024)   # 96 MiB on 128 MiB parts, 48 MiB on v7x
    x_it = jnp.dtype(v_tangent.dtype).itemsize
    w_it = jnp.dtype(w1.dtype).itemsize
    fixed = (2 * tm * D * x_it            # input tile, double-buffered
             + 2 * tm * D * x_it          # output tile, double-buffered
             + tm * D * 4                 # f32 accumulator (chunked path only; budgeted anyway)
             + 2 * D * w_it               # b2
             + (4 << 20))                 # compiler internal scratch / headroom
    weight_budget = max(vmem_limit - fixed, 2 << 20)

    if h_chunk is not None:
        assert H % h_chunk == 0 and (h_chunk == H or h_chunk % 128 == 0)
        th = h_chunk
    else:
        th = _choose_h_chunk(D, H, w_it, weight_budget)
    n_hc = H // th

    b1_2 = b1.reshape(1, H)
    b2_2 = b2.reshape(1, D)
    out_shape = jax.ShapeDtypeStruct((M, D), v_tangent.dtype)

    if n_hc == 1:
        # Common case: weights fully resident, DMA'd from HBM once; no accumulator scratch.
        out = pl.pallas_call(
            functools.partial(_fused_kernel, use_tanh_gelu=use_tanh_gelu),
            out_shape=out_shape,
            grid=(n_rows,),
            in_specs=[
                pl.BlockSpec((tm, D), lambda i: (i, 0)),   # activation rows
                pl.BlockSpec((D, H), lambda i: (0, 0)),    # W1 (constant block -> one DMA)
                pl.BlockSpec((1, H), lambda i: (0, 0)),    # b1
                pl.BlockSpec((H, D), lambda i: (0, 0)),    # W2
                pl.BlockSpec((1, D), lambda i: (0, 0)),    # b2
            ],
            out_specs=pl.BlockSpec((tm, D), lambda i: (i, 0)),
            compiler_params=pltpu.CompilerParams(
                dimension_semantics=("parallel",),
                vmem_limit_bytes=vmem_limit,
            ),
        )(x2, w1, b1_2, w2, b2_2)
    else:
        # Hidden dim too large to keep resident: chunk H, accumulate in f32 VMEM scratch.
        out = pl.pallas_call(
            functools.partial(_chunked_kernel, use_tanh_gelu=use_tanh_gelu),
            out_shape=out_shape,
            grid=(n_rows, n_hc),
            in_specs=[
                pl.BlockSpec((tm, D), lambda i, k: (i, 0)),   # activation rows
                pl.BlockSpec((D, th), lambda i, k: (0, k)),   # W1 H-chunk
                pl.BlockSpec((1, th), lambda i, k: (0, k)),   # b1 H-chunk
                pl.BlockSpec((th, D), lambda i, k: (k, 0)),   # W2 H-chunk
                pl.BlockSpec((1, D), lambda i, k: (0, 0)),    # b2 (constant block)
            ],
            out_specs=pl.BlockSpec((tm, D), lambda i, k: (i, 0)),
            scratch_shapes=[pltpu.VMEM((tm, D), jnp.float32)],
            compiler_params=pltpu.CompilerParams(
                dimension_semantics=("parallel", "arbitrary"),
                vmem_limit_bytes=vmem_limit,
            ),
        )(x2, w1, b1_2, w2, b2_2)

    return out.reshape(orig_shape)


# ----------------------------------------------------------------------------- params


def _xavier_uniform(key, fan_in, fan_out, dtype=jnp.float32):
    bound = math.sqrt(6.0 / (fan_in + fan_out))
    # PyTorch stores weight as (out, in); the kernel uses the transposed (in, out) layout.
    # Xavier bound is symmetric in fan_in/fan_out, so the init distribution matches.
    return jax.random.uniform(key, (fan_in, fan_out), dtype, minval=-bound, maxval=bound)


def make_tangent_flow_params(key, dim, hidden_dim_ratio=0.5):
    hidden = max(16, int(dim * hidden_dim_ratio))
    k1, k2 = jax.random.split(key)
    w1 = _xavier_uniform(k1, dim, hidden)        # (D, H)
    b1 = jnp.zeros((hidden,), jnp.float32)
    w2 = _xavier_uniform(k2, hidden, dim)        # (H, D)
    b2 = jnp.zeros((dim,), jnp.float32)
    return w1, b1, w2, b2


# ----------------------------------------------------------------------------- demo


if __name__ == "__main__":
    key = jax.random.PRNGKey(0)
    k_x, k_p, k_xr = jax.random.split(key, 3)

    # Case 1: dim=128 (hidden=64), batch=2, seq=8 -> fused (n_hc==1) kernel path.
    batch, seq, dim = 2, 8, 128
    w1, b1, w2, b2 = make_tangent_flow_params(k_p, dim)
    v = jax.random.normal(k_x, (batch, seq, dim), jnp.float32)
    out = jax.block_until_ready(tangent_flow_mlp(v, w1, b1, w2, b2))
    ref = _flow_reference(v.reshape(-1, dim), w1, b1, w2, b2, False).reshape(v.shape)
    assert out.shape == v.shape and out.dtype == v.dtype
    assert jnp.allclose(out, ref, atol=1e-5, rtol=1e-5)

    # Case 2: ragged row count (M=21, not a multiple of 8) -> un-padded boundary tile.
    v_r = jax.random.normal(k_xr, (3, 7, dim), jnp.float32)
    out_r = jax.block_until_ready(tangent_flow_mlp(v_r, w1, b1, w2, b2))
    ref_r = _flow_reference(v_r.reshape(-1, dim), w1, b1, w2, b2, False).reshape(v_r.shape)
    assert jnp.allclose(out_r, ref_r, atol=1e-5, rtol=1e-5)

    # Case 3: forced H-chunking (dim=512, hidden=256, chunk 128) -> reduction-axis kernel.
    dim3 = 512
    w1c, b1c, w2c, b2c = make_tangent_flow_params(jax.random.PRNGKey(1), dim3)
    v3 = jax.random.normal(jax.random.PRNGKey(2), (2, 8, dim3), jnp.float32)
    out3 = jax.block_until_ready(tangent_flow_mlp(v3, w1c, b1c, w2c, b2c, h_chunk=128))
    ref3 = _flow_reference(v3.reshape(-1, dim3), w1c, b1c, w2c, b2c, False).reshape(v3.shape)
    assert jnp.allclose(out3, ref3, atol=1e-4, rtol=1e-4)

    print("KERNEL_OK")
</pallas_src>

<mosaic_0001>
module attributes {stable_mosaic.version = 11 : i64} {
  func.func @_fused_kernel(%arg0: i32, %arg1: memref<16x128xf32, #tpu.memory_space<vmem>>, %arg2: memref<128x64xf32, #tpu.memory_space<vmem>>, %arg3: memref<1x64xf32, #tpu.memory_space<vmem>>, %arg4: memref<64x128xf32, #tpu.memory_space<vmem>>, %arg5: memref<1x128xf32, #tpu.memory_space<vmem>>, %arg6: memref<16x128xf32, #tpu.memory_space<vmem>>) attributes {dimension_semantics = [#tpu.dimension_semantics<parallel>], iteration_bounds = array<i64: 1>, scalar_prefetch = 0 : i64, scratch_operands = 0 : i64, tpu.core_type = #tpu.core_type<tc>, window_params = [{transform_indices = @transform_0, window_bounds = array<i64: 16, 128>}, {pipeline_mode = #tpu.pipeline_mode<synchronous>, transform_indices = @transform_1, window_bounds = array<i64: 128, 64>}, {pipeline_mode = #tpu.pipeline_mode<synchronous>, transform_indices = @transform_2, window_bounds = array<i64: 1, 64>}, {pipeline_mode = #tpu.pipeline_mode<synchronous>, transform_indices = @transform_3, window_bounds = array<i64: 64, 128>}, {pipeline_mode = #tpu.pipeline_mode<synchronous>, transform_indices = @transform_4, window_bounds = array<i64: 1, 128>}, {transform_indices = @transform_5, window_bounds = array<i64: 16, 128>}]} {
    %c0 = arith.constant 0 : index
    %c0_0 = arith.constant 0 : index
    %0 = vector.load %arg1[%c0, %c0_0] : memref<16x128xf32, #tpu.memory_space<vmem>>, vector<16x128xf32>
    %c0_1 = arith.constant 0 : index
    %c0_2 = arith.constant 0 : index
    %1 = vector.load %arg2[%c0_1, %c0_2] : memref<128x64xf32, #tpu.memory_space<vmem>>, vector<128x64xf32>
    %cst = arith.constant dense<0.000000e+00> : vector<16x64xf32>
    %2 = tpu.matmul %0, %1, %cst {dimension_numbers = #tpu.dot_dimension_numbers<[1], [0], [0], [1], [0, 0, 1, 1], [], []>} : vector<16x128xf32>, vector<128x64xf32>, vector<16x64xf32> -> vector<16x64xf32>
    %c0_3 = arith.constant 0 : index
    %c0_4 = arith.constant 0 : index
    %3 = vector.load %arg3[%c0_3, %c0_4] : memref<1x64xf32, #tpu.memory_space<vmem>>, vector<1x64xf32>
    %4 = vector.broadcast %3 : vector<1x64xf32> to vector<16x64xf32>
    %5 = arith.addf %2, %4 : vector<16x64xf32>
    %cst_5 = arith.constant 5.000000e-01 : f32
    %6 = vector.broadcast %cst_5 : f32 to vector<16x64xf32>
    %7 = arith.mulf %6, %5 : vector<16x64xf32>
    %cst_6 = arith.constant 0.707106769 : f32
    %8 = vector.broadcast %cst_6 : f32 to vector<16x64xf32>
    %9 = arith.mulf %5, %8 : vector<16x64xf32>
    %10 = math.erf %9 : vector<16x64xf32>
    %cst_7 = arith.constant 1.000000e+00 : f32
    %11 = vector.broadcast %cst_7 : f32 to vector<16x64xf32>
    %12 = arith.addf %11, %10 : vector<16x64xf32>
    %13 = arith.mulf %7, %12 : vector<16x64xf32>
    %c0_8 = arith.constant 0 : index
    %c0_9 = arith.constant 0 : index
    %14 = vector.load %arg4[%c0_8, %c0_9] : memref<64x128xf32, #tpu.memory_space<vmem>>, vector<64x128xf32>
    %cst_10 = arith.constant dense<0.000000e+00> : vector<16x128xf32>
    %15 = tpu.matmul %13, %14, %cst_10 {dimension_numbers = #tpu.dot_dimension_numbers<[1], [0], [0], [1], [0, 0, 1, 1], [], []>} : vector<16x64xf32>, vector<64x128xf32>, vector<16x128xf32> -> vector<16x128xf32>
    %c0_11 = arith.constant 0 : index
    %c0_12 = arith.constant 0 : index
    %16 = vector.load %arg5[%c0_11, %c0_12] : memref<1x128xf32, #tpu.memory_space<vmem>>, vector<1x128xf32>
    %17 = vector.broadcast %16 : vector<1x128xf32> to vector<16x128xf32>
    %18 = arith.addf %15, %17 : vector<16x128xf32>
    %19 = tpu.weird %18 : vector<16x128xf32> -> vector<16x128xi1>
    %cst_13 = arith.constant dense<true> : vector<16x128xi1>
    %20 = arith.xori %19, %cst_13 : vector<16x128xi1>
    %cst_14 = arith.constant 0.000000e+00 : f32
    %21 = vector.broadcast %cst_14 : f32 to vector<16x128xf32>
    %22 = arith.select %20, %18, %21 : vector<16x128xi1>, vector<16x128xf32>
    %c0_15 = arith.constant 0 : index
    %c0_16 = arith.constant 0 : index
    %23 = vector.load %arg6[%c0_15, %c0_16] : memref<16x128xf32, #tpu.memory_space<vmem>>, vector<16x128xf32>
    tpu.vector_store %arg6[%c0_15, %c0_16], %22 {strides = array<i32>} : memref<16x128xf32, #tpu.memory_space<vmem>>, vector<16x128xf32>,
    return
  }
  func.func @transform_0(%arg0: i32) -> (i32, i32) {
    %c0_i32 = arith.constant 0 : i32
    %c0_i32_0 = arith.constant 0 : i32
    return %arg0, %c0_i32 : i32, i32
  }
  func.func @transform_1(%arg0: i32) -> (i32, i32) {
    %c0_i32 = arith.constant 0 : i32
    %c0_i32_0 = arith.constant 0 : i32
    %c0_i32_1 = arith.constant 0 : i32
    return %c0_i32, %c0_i32_0 : i32, i32
  }
  func.func @transform_2(%arg0: i32) -> (i32, i32) {
    %c0_i32 = arith.constant 0 : i32
    %c0_i32_0 = arith.constant 0 : i32
    %c0_i32_1 = arith.constant 0 : i32
    return %c0_i32, %c0_i32_0 : i32, i32
  }
  func.func @transform_3(%arg0: i32) -> (i32, i32) {
    %c0_i32 = arith.constant 0 : i32
    %c0_i32_0 = arith.constant 0 : i32
    %c0_i32_1 = arith.constant 0 : i32
    return %c0_i32, %c0_i32_0 : i32, i32
  }
  func.func @transform_4(%arg0: i32) -> (i32, i32) {
    %c0_i32 = arith.constant 0 : i32
    %c0_i32_0 = arith.constant 0 : i32
    %c0_i32_1 = arith.constant 0 : i32
    return %c0_i32, %c0_i32_0 : i32, i32
  }
  func.func @transform_5(%arg0: i32) -> (i32, i32) {
    %c0_i32 = arith.constant 0 : i32
    %c0_i32_0 = arith.constant 0 : i32
    return %arg0, %c0_i32 : i32, i32
  }
}

</mosaic_0001>

<llo_original>
// kernel: tpu_custom_call.1
$region0: #{tpu_custom_call.1}
  #allocation0 [shape = 'u32[]', space=smem, size = 0x4, offset = 0x4, fixed_abs, tag = 'smem constant byte address 0x4 - core index']
  #allocation1 [shape = 'u32[144,128]{1,0:T(1,128)}', space=vmem, size = 0x12000, scoped, tag = 'internal scratch']
  %s0 = inlined_call_operand.vmem [shape: f32[16,128], index: 0, kind: input, shape index: {}]
  %s1 = inlined_call_operand.vmem [shape: f32[128,64], index: 1, kind: input, shape index: {}]
  %s2 = inlined_call_operand.vmem [shape: f32[1,64], index: 2, kind: input, shape index: {}]
  %s3 = inlined_call_operand.vmem [shape: f32[64,128], index: 3, kind: input, shape index: {}]
  %s4 = inlined_call_operand.vmem [shape: f32[1,128], index: 4, kind: input, shape index: {}]
  %s5 = inlined_call_operand.hbm [shape: f32[16,128], index: 5, kind: output, shape index: {}]
  %s6 = sld [smem:[#allocation0]]
  $region30: #{tpu_custom_call.1} parent=0
    _
  %s8 = ssub.s32 1, %s6
  %s9 = scalar_select 0, %s8, %s6
  $region1: #{tpu_custom_call.1} parent=0
    #allocation2 [shape = 'u8[8192]{0}', space=vmem, size = 0x2000, scoped, tag = 'output window, operand 0, single buffered']
    #allocation3 [shape = 's32[1]{0}', space=sflag, size = 0x4, scoped, tag = 'scoped memory for tpu_custom_call.1']
    %10 = vsyncpa [#allocation3], 0
    // Predicated region
    $region2: #{tpu_custom_call.1} parent=1 // pred_check
      _
    $region3: #{tpu_custom_call.1} parent=1 // pred_check_branch
      %12 = sbr.rel (0) target = $region5
    $region4: #{tpu_custom_call.1} parent=1 // pred_region
      _
    $region5: #{tpu_custom_call.1} parent=1 // pred_fallthru
      _
    // Predicated region
    $region6: #{tpu_custom_call.1} parent=1 // pred_check
      _
    $region7: #{tpu_custom_call.1} parent=1 // pred_check_branch
      %14 = sbr.rel (0) target = $region9
    $region8: #{tpu_custom_call.1} parent=1 // pred_region
      _
    $region9: #{tpu_custom_call.1} parent=1 // pred_fallthru
      _
    // Predicated region
    $region10: #{tpu_custom_call.1} parent=1 // pred_check
      _
    $region11: #{tpu_custom_call.1} parent=1 // pred_check_branch
      %16 = sbr.rel (0) target = $region13
    $region12: #{tpu_custom_call.1} parent=1 // pred_region
      _
    $region13: #{tpu_custom_call.1} parent=1 // pred_fallthru
      _
    // Predicated region
    $region14: #{tpu_custom_call.1} parent=1 // pred_check
      _
    $region15: #{tpu_custom_call.1} parent=1 // pred_check_branch
      %18 = sbr.rel (0) target = $region17
    $region16: #{tpu_custom_call.1} parent=1 // pred_region
      _
    $region17: #{tpu_custom_call.1} parent=1 // pred_fallthru
      _
    // Predicated region
    $region18: #{tpu_custom_call.1} parent=1 // pred_check
      _
    $region19: #{tpu_custom_call.1} parent=1 // pred_check_branch
      %20 = sbr.rel (0) target = $region21
    $region20: #{tpu_custom_call.1} parent=1 // pred_region
      _
    $region21: #{tpu_custom_call.1} parent=1 // pred_fallthru
      _
    %v21 = vld [vmem:[%s0] sm:$0xff]
    %v22 = vld [vmem:[%s0 + $0x8] sm:$0xff]
    %v23 = vld [vmem:[%s1] sm:$0xff]
    %v24 = vld [vmem:[%s1 + $0x8] sm:$0xff]
    %v25 = vld [vmem:[%s1 + $0x10] sm:$0xff]
    %v26 = vld [vmem:[%s1 + $0x18] sm:$0xff]
    %v27 = vld [vmem:[%s1 + $0x20] sm:$0xff]
    %v28 = vld [vmem:[%s1 + $0x28] sm:$0xff]
    %v29 = vld [vmem:[%s1 + $0x30] sm:$0xff]
    %v30 = vld [vmem:[%s1 + $0x38] sm:$0xff]
    %v31 = vld [vmem:[%s1 + $0x40] sm:$0xff]
    %v32 = vld [vmem:[%s1 + $0x48] sm:$0xff]
    %v33 = vld [vmem:[%s1 + $0x50] sm:$0xff]
    %v34 = vld [vmem:[%s1 + $0x58] sm:$0xff]
    %v35 = vld [vmem:[%s1 + $0x60] sm:$0xff]
    %v36 = vld [vmem:[%s1 + $0x68] sm:$0xff]
    %v37 = vld [vmem:[%s1 + $0x70] sm:$0xff]
    %v38 = vld [vmem:[%s1 + $0x78] sm:$0xff]
    %v39 = vld [vmem:[%s2] sm:$0x1]
    %v41 = vlaneseq
    %v42 = vshrl.u32 %v41, 7
    %v43 = vsub.s32 0, %v42
    %v44 = vrot.slane %v39, %v43
    %46 = vmatprep.subr.mxu0 0.0
    %47 = vmatpush1.msra.mxu0 %v23
    %48 = vmatprep.subr.mxu0 0.0
    %49 = vmatpush1.msra.mxu0 %v24
    %50 = vmatprep.subr.mxu0 0.0
    %51 = vmatpush1.msra.mxu0 %v25
    %52 = vmatprep.subr.mxu0 0.0
    %53 = vmatpush1.msra.mxu0 %v26
    %54 = vmatprep.subr.mxu0 0.0
    %55 = vmatpush1.msra.mxu0 %v27
    %56 = vmatprep.subr.mxu0 0.0
    %57 = vmatpush1.msra.mxu0 %v28
    %58 = vmatprep.subr.mxu0 0.0
    %59 = vmatpush1.msra.mxu0 %v29
    %60 = vmatprep.subr.mxu0 0.0
    %61 = vmatpush1.msra.mxu0 %v30
    %62 = vmatprep.subr.mxu0 0.0
    %63 = vmatpush1.msra.mxu0 %v31
    %64 = vmatprep.subr.mxu0 0.0
    %65 = vmatpush1.msra.mxu0 %v32
    %66 = vmatprep.subr.mxu0 0.0
    %67 = vmatpush1.msra.mxu0 %v33
    %68 = vmatprep.subr.mxu0 0.0
    %69 = vmatpush1.msra.mxu0 %v34
    %70 = vmatprep.subr.mxu0 0.0
    %71 = vmatpush1.msra.mxu0 %v35
    %72 = vmatprep.subr.mxu0 0.0
    %73 = vmatpush1.msra.mxu0 %v36
    %74 = vmatprep.subr.mxu0 0.0
    %75 = vmatpush1.msra.mxu0 %v37
    %76 = vmatprep.subr.mxu0 0.0
    %77 = vmatpush1.msra.mxu0 %v38
    %78 = vmatprep.subr.mxu0 0.0
    %79 = vmatpush1.msra.mxu0 0.0
    %80 = vmatprep.subr.mxu0 0.0
    %81 = vmatpush1.msra.mxu0 0.0
    %82 = vmatprep.subr.mxu0 0.0
    %83 = vmatpush1.msra.mxu0 0.0
    %84 = vmatprep.subr.mxu0 0.0
    %85 = vmatpush1.msra.mxu0 0.0
    %86 = vmatprep.subr.mxu0 0.0
    %87 = vmatpush1.msra.mxu0 0.0
    %88 = vmatprep.subr.mxu0 0.0
    %89 = vmatpush1.msra.mxu0 0.0
    %90 = vmatprep.subr.mxu0 0.0
    %91 = vmatpush1.msra.mxu0 0.0
    %92 = vmatprep.subr.mxu0 0.0
    %93 = vmatpush1.msra.mxu0 0.0
    %94 = vmatprep.subr.mxu0 0.0
    %95 = vmatpush1.msra.mxu0 0.0
    %96 = vmatprep.subr.mxu0 0.0
    %97 = vmatpush1.msra.mxu0 0.0
    %98 = vmatprep.subr.mxu0 0.0
    %99 = vmatpush1.msra.mxu0 0.0
    %100 = vmatprep.subr.mxu0 0.0
    %101 = vmatpush1.msra.mxu0 0.0
    %102 = vmatprep.subr.mxu0 0.0
    %103 = vmatpush1.msra.mxu0 0.0
    %104 = vmatprep.subr.mxu0 0.0
    %105 = vmatpush1.msra.mxu0 0.0
    %106 = vmatprep.subr.mxu0 0.0
    %107 = vmatpush1.msra.mxu0 0.0
    %108 = vmatprep.subr.mxu0 0.0
    %109 = vmatpush1.msra.mxu0 0.0
    %110 = vmatprep.mubr.f32.mxu0 0.0
    %111 = vmatmul.mubr.f32.gmra.mrb[0].mxu0 %v21
    %v112 = vpop.f32.mrb[0].mxu0
    %v113 = vadd.f32 %v44, %v112
    %v114 = vpop.f32.mrb[0].mxu0
    %115 = vmatprep.mubr.f32.mxu0 0.0
    %116 = vmatmul.mubr.f32.gmra.mrb[0].mxu0 %v22
    %v117 = vpop.f32.mrb[0].mxu0
    %v118 = vadd.f32 %v44, %v117
    %v119 = vpop.f32.mrb[0].mxu0
    %120 = vdwg.mxu0
    %v121 = vmul.f32 %v113, 0.5
    %v122 = vmul.f32 %v118, 0.5
    %v123 = vmul.f32 %v113, 0.70710677
    %v124 = vmul.f32 %v118, 0.70710677
    %v125 = verf.f32.pop %v123
    %v126 = verf.f32.pop %v124
    %v127 = vadd.f32 %v125, 1.0
    %v128 = vadd.f32 %v126, 1.0
    %v129 = vmul.f32 %v121, %v127
    %v130 = vmul.f32 %v122, %v128
    %v131 = vld [vmem:[%s3] sm:$0xff]
    %v132 = vld [vmem:[%s3 + $0x8] sm:$0xff]
    %v133 = vld [vmem:[%s3 + $0x10] sm:$0xff]
    %v134 = vld [vmem:[%s3 + $0x18] sm:$0xff]
    %v135 = vld [vmem:[%s3 + $0x20] sm:$0xff]
    %v136 = vld [vmem:[%s3 + $0x28] sm:$0xff]
    %v137 = vld [vmem:[%s3 + $0x30] sm:$0xff]
    %v138 = vld [vmem:[%s3 + $0x38] sm:$0xff]
    %v139 = vld [vmem:[%s4] sm:$0x1]
    %v141 = vlaneseq
    %v142 = vshrl.u32 %v141, 7
    %v143 = vsub.s32 0, %v142
    %v144 = vrot.slane %v139, %v143
    %vm146 = vcmask 523264
    %v148 = vsel %vm146, %v129, 0
    %v151 = vsel %vm146, %v130, 0
    %153 = vmatprep.subr.mxu0 0.0
    %154 = vmatpush1.msra.mxu0 %v131
    %155 = vmatprep.subr.mxu0 0.0
    %156 = vmatpush1.msra.mxu0 %v132
    %157 = vmatprep.subr.mxu0 0.0
    %158 = vmatpush1.msra.mxu0 %v133
    %159 = vmatprep.subr.mxu0 0.0
    %160 = vmatpush1.msra.mxu0 %v134
    %161 = vmatprep.subr.mxu0 0.0
    %162 = vmatpush1.msra.mxu0 %v135
    %163 = vmatprep.subr.mxu0 0.0
    %164 = vmatpush1.msra.mxu0 %v136
    %165 = vmatprep.subr.mxu0 0.0
    %166 = vmatpush1.msra.mxu0 %v137
    %167 = vmatprep.subr.mxu0 0.0
    %168 = vmatpush1.msra.mxu0 %v138
    %169 = vmatprep.subr.mxu0 0.0
    %170 = vmatpush1.msra.mxu0 0.0
    %171 = vmatprep.subr.mxu0 0.0
    %172 = vmatpush1.msra.mxu0 0.0
    %173 = vmatprep.subr.mxu0 0.0
    %174 = vmatpush1.msra.mxu0 0.0
    %175 = vmatprep.subr.mxu0 0.0
    %176 = vmatpush1.msra.mxu0 0.0
    %177 = vmatprep.subr.mxu0 0.0
    %178 = vmatpush1.msra.mxu0 0.0
    %179 = vmatprep.subr.mxu0 0.0
    %180 = vmatpush1.msra.mxu0 0.0
    %181 = vmatprep.subr.mxu0 0.0
    %182 = vmatpush1.msra.mxu0 0.0
    %183 = vmatprep.subr.mxu0 0.0
    %184 = vmatpush1.msra.mxu0 0.0
    %185 = vmatprep.subr.mxu0 0.0
    %186 = vmatpush1.msra.mxu0 0.0
    %187 = vmatprep.subr.mxu0 0.0
    %188 = vmatpush1.msra.mxu0 0.0
    %189 = vmatprep.subr.mxu0 0.0
    %190 = vmatpush1.msra.mxu0 0.0
    %191 = vmatprep.subr.mxu0 0.0
    %192 = vmatpush1.msra.mxu0 0.0
    %193 = vmatprep.subr.mxu0 0.0
    %194 = vmatpush1.msra.mxu0 0.0
    %195 = vmatprep.subr.mxu0 0.0
    %196 = vmatpush1.msra.mxu0 0.0
    %197 = vmatprep.subr.mxu0 0.0
    %198 = vmatpush1.msra.mxu0 0.0
    %199 = vmatprep.subr.mxu0 0.0
    %200 = vmatpush1.msra.mxu0 0.0
    %201 = vmatprep.subr.mxu0 0.0
    %202 = vmatpush1.msra.mxu0 0.0
    %203 = vmatprep.subr.mxu0 0.0
    %204 = vmatpush1.msra.mxu0 0.0
    %205 = vmatprep.subr.mxu0 0.0
    %206 = vmatpush1.msra.mxu0 0.0
    %207 = vmatprep.subr.mxu0 0.0
    %208 = vmatpush1.msra.mxu0 0.0
    %209 = vmatprep.subr.mxu0 0.0
    %210 = vmatpush1.msra.mxu0 0.0
    %211 = vmatprep.subr.mxu0 0.0
    %212 = vmatpush1.msra.mxu0 0.0
    %213 = vmatprep.subr.mxu0 0.0
    %214 = vmatpush1.msra.mxu0 0.0
    %215 = vmatprep.subr.mxu0 0.0
    %216 = vmatpush1.msra.mxu0 0.0
    %217 = vmatprep.mubr.f32.mxu0 0.0
    %218 = vmatmul.mubr.f32.gmra.mrb[0].mxu0 %v148
    %v219 = vpop.f32.mrb[0].mxu0
    %v220 = vadd.f32 %v144, %v219
    %v221 = vpop.f32.mrb[0].mxu0
    %222 = vmatprep.mubr.f32.mxu0 0.0
    %223 = vmatmul.mubr.f32.gmra.mrb[0].mxu0 %v151
    %v224 = vpop.f32.mrb[0].mxu0
    %v225 = vadd.f32 %v144, %v224
    %v226 = vpop.f32.mrb[0].mxu0
    %227 = vdwg.mxu0
    %vm228 = vweird.f32 %v220
    %vm229 = vweird.f32 %v225
    %vm230 = vmxor %vm228, 1
    %vm231 = vmxor %vm229, 1
    %v232 = vsel %vm230, %v220, 0.0
    %v233 = vsel %vm231, %v225, 0.0
    %234 = vst [vmem:[#allocation2] sm:$0xff] %v232
    %235 = vst [vmem:[#allocation2 + $0x8] sm:$0xff] %v233
    // Predicated region
    $region22: #{tpu_custom_call.1} parent=1 // pred_check
      _
    $region23: #{tpu_custom_call.1} parent=1 // pred_check_branch
      %237 = sbr.rel (0) target = $region25
    $region24: #{tpu_custom_call.1} parent=1 // pred_region
      %s239 = ssub.s32 256, 256
      %240 = vsyncadd [#allocation3], %s239
      %s241 = sshll.u32 [#allocation2], 4
      %s242 = int_to_ptr.vmem [resolvable:$true] %s241
      %247 = dma.vmem_to_hbm [thread:$0]  %s242, 256, %s5, [#allocation3], 128, 128, 8
    $region25: #{tpu_custom_call.1} parent=1 // pred_fallthru
      _
    // Predicated region
    $region26: #{tpu_custom_call.1} parent=1 // pred_check
      _
    $region27: #{tpu_custom_call.1} parent=1 // pred_check_branch
      %249 = sbr.rel (0) target = $region29
    $region28: #{tpu_custom_call.1} parent=1 // pred_region
      %250 = dma.done [#allocation3], 256
    $region29: #{tpu_custom_call.1} parent=1 // pred_fallthru
      _
    %251 = vsyncpa [#allocation3], 1

</llo_original>
